<compile_context>
chip_gen: v6e
topology: v6e:2x2x1
jax: 0.10.0
libtpu: 0.0.40
codegen_flags: <defaults>
</compile_context>

<pallas_src>
import functools

import jax
import jax.numpy as jnp
from jax.experimental import pallas as pl
from jax.experimental.pallas import tpu as pltpu


def _sepconv_kernel(x_ref, dw_ref, w_ref, b_ref, o_ref, xp_ref, *,
                    kernel_size, pad, out_len, mxu_dtype):
    """One grid step = TB batch elements.

    x_ref  : (TB, L, C_in)            un-padded input block
    dw_ref : (K, C_in)                depthwise weights (tap k, channel c)
    w_ref  : (C_in, C_out)            pointwise Linear weight (pre-transposed, mxu dtype)
    b_ref  : (1, C_out)               pointwise Linear bias (f32)
    o_ref  : (TB, out_len, C_out)
    xp_ref : (TB, L + 2*pad, C_in)    VMEM scratch holding the haloed input
    """
    tb, seq_in, c_in = x_ref.shape
    c_out = o_ref.shape[-1]

    # --- Build the haloed input in VMEM (replaces the wrapper-side jnp.pad). ---
    if pad > 0:
        # Zero the halo rows every step (cheap; safe under megacore "parallel").
        xp_ref[:, :pad, :] = jnp.zeros((tb, pad, c_in), dtype=xp_ref.dtype)
        xp_ref[:, pad + seq_in:, :] = jnp.zeros(
            (tb, xp_ref.shape[1] - pad - seq_in, c_in), dtype=xp_ref.dtype)
    xp_ref[:, pad:pad + seq_in, :] = x_ref[...]

    # --- Depthwise conv along L (VPU, f32 accumulate). ---
    acc = None
    for k in range(kernel_size):  # static unroll over the small kernel taps
        dwk = dw_ref[k, :].astype(jnp.float32).reshape(1, 1, c_in)
        term = xp_ref[:, k:k + out_len, :].astype(jnp.float32) * dwk
        acc = term if acc is None else acc + term

    # --- Pointwise Linear over channels: one big MXU matmul over TB*out_len rows. ---
    rows = tb * out_len
    acc2 = acc.reshape(rows, c_in)                       # merge leading dims (layout no-op)
    y = jnp.dot(acc2.astype(mxu_dtype), w_ref[...].astype(mxu_dtype),
                preferred_element_type=jnp.float32)
    y = y + b_ref[...].astype(jnp.float32)
    o_ref[...] = y.reshape(tb, out_len, c_out).astype(o_ref.dtype)


def _pick_batch_block(bs, out_len, target_rows=512):
    """Largest divisor TB of bs with TB*out_len <= target_rows, keeping >=2 grid
    steps when bs >= 2 (v7x has 2 TensorCores)."""
    if out_len % 8 != 0:
        # Keep TB=1 so in-kernel reshapes stay trivial for ragged out_len (even K).
        return 1
    best = 1
    for tb in range(1, bs + 1):
        if bs % tb != 0:
            continue
        if tb * out_len > target_rows:
            continue
        if bs >= 2 and bs // tb < 2:
            continue
        best = tb
    return best


def separable_conv1d(x, dw_weight, pw_weight, pw_bias, *, kernel_size,
                     stride=1, padding=None, mxu_dtype=None, target_rows=512):
    """x: (B, L, C_in) channels-last. Returns the module's forward output,
    i.e. pointwise(depthwise(x)) reshaped like `inputs.view(bs, -1, dims)`.

    mxu_dtype: dtype fed to the MXU for the pointwise matmul (accumulation is
    always f32). Use jnp.bfloat16 on v6e/v7x for 2x MXU throughput; default is
    the input dtype.
    """
    assert stride == 1, "only stride=1 is supported"  # TODO(synk): stride > 1
    bs, seqlen, c_in = x.shape
    c_out, c_in_w = pw_weight.shape
    assert c_in_w == c_in, (c_in_w, c_in)
    pad = (kernel_size - 1) // 2 if padding is None else padding
    out_len = seqlen + 2 * pad - kernel_size + 1
    assert out_len >= 1, "kernel_size too large for this sequence length"

    if mxu_dtype is None:
        mxu_dtype = x.dtype

    # Depthwise weight (C_in, 1, K) -> (K, C_in); Linear weight (C_out, C_in) -> (C_in, C_out).
    dw = jnp.transpose(dw_weight[:, 0, :], (1, 0))
    w = jnp.transpose(pw_weight, (1, 0)).astype(mxu_dtype)   # pre-cast: bf16 halves w DMA
    b = pw_bias.reshape(1, c_out).astype(jnp.float32)

    tb = _pick_batch_block(bs, out_len, target_rows)
    lp = seqlen + 2 * pad

    kern = functools.partial(_sepconv_kernel, kernel_size=kernel_size, pad=pad,
                             out_len=out_len, mxu_dtype=mxu_dtype)

    out = pl.pallas_call(
        kern,
        out_shape=jax.ShapeDtypeStruct((bs, out_len, c_out), x.dtype),
        grid_spec=pltpu.PrefetchScalarGridSpec(
            num_scalar_prefetch=0,
            grid=(bs // tb,),
            in_specs=[
                pl.BlockSpec((tb, seqlen, c_in), lambda i: (i, 0, 0)),
                # Constant index_maps -> weights/bias stay resident in VMEM.
                pl.BlockSpec((kernel_size, c_in), lambda i: (0, 0)),
                pl.BlockSpec((c_in, c_out), lambda i: (0, 0)),
                pl.BlockSpec((1, c_out), lambda i: (0, 0)),
            ],
            out_specs=pl.BlockSpec((tb, out_len, c_out), lambda i: (i, 0, 0)),
            scratch_shapes=[pltpu.VMEM((tb, lp, c_in), x.dtype)],
        ),
        compiler_params=pltpu.CompilerParams(
            dimension_semantics=("parallel",)),
    )(x, dw, w, b)

    # Mirrors `inputs.view(bs, -1, dims)` in the PyTorch forward (dims == in_channels
    # for channels_last). Note: this only leaves channels intact when c_out == c_in;
    # otherwise it folds channels into the sequence axis exactly like the module does
    # (and errors, like torch.view, if out_len*c_out is not divisible by c_in).
    return out.reshape(bs, -1, c_in)


def _reference(x, dw_weight, pw_weight, pw_bias, *, kernel_size, padding=None):
    """Pure-JAX reference for correctness checking."""
    bs, seqlen, c_in = x.shape
    pad = (kernel_size - 1) // 2 if padding is None else padding
    out_len = seqlen + 2 * pad - kernel_size + 1
    xp = jnp.pad(x, ((0, 0), (pad, pad), (0, 0)))
    dw = jnp.transpose(dw_weight[:, 0, :], (1, 0))  # (K, C_in)
    acc = jnp.zeros((bs, out_len, c_in), jnp.float32)
    for k in range(kernel_size):
        acc = acc + xp[:, k:k + out_len, :].astype(jnp.float32) * dw[k, :]
    y = jnp.einsum('blc,oc->blo', acc, pw_weight,
                   precision=jax.lax.Precision.HIGHEST) + pw_bias
    return y.reshape(bs, -1, c_in)


if __name__ == "__main__":
    # Module config: in_channels = out_channels = 128, kernel_size = 3,
    # channels_last=True -> input is (batch, seqlen, in_channels).
    batch, seqlen, in_ch, out_ch, ksize = 8, 16, 128, 128, 3

    key = jax.random.PRNGKey(0)
    kx, kd, kw, kb = jax.random.split(key, 4)

    x = jax.random.normal(kx, (batch, seqlen, in_ch), dtype=jnp.float32)
    # Depthwise Conv1d weight: (in_channels, in_channels/groups=1, kernel_size)
    dw_weight = 0.1 * jax.random.normal(kd, (in_ch, 1, ksize), dtype=jnp.float32)
    # Pointwise Linear: weight (out, in), bias (out,)
    pw_weight = 0.1 * jax.random.normal(kw, (out_ch, in_ch), dtype=jnp.float32)
    pw_bias = 0.1 * jax.random.normal(kb, (out_ch,), dtype=jnp.float32)

    ref = _reference(x, dw_weight, pw_weight, pw_bias, kernel_size=ksize)

    # f32 MXU path (exact check).
    out = separable_conv1d(x, dw_weight, pw_weight, pw_bias, kernel_size=ksize)
    out = jax.block_until_ready(out)
    assert out.shape == ref.shape, (out.shape, ref.shape)
    assert jnp.allclose(out, ref, atol=1e-4, rtol=1e-4), "f32 mismatch vs reference"

    # bf16-at-the-MXU path (v6e/v7x recommendation), f32 accumulation -> loose check.
    out_bf = separable_conv1d(x, dw_weight, pw_weight, pw_bias, kernel_size=ksize,
                              mxu_dtype=jnp.bfloat16)
    out_bf = jax.block_until_ready(out_bf)
    assert out_bf.shape == ref.shape, (out_bf.shape, ref.shape)
    assert jnp.allclose(out_bf, ref, atol=2e-2, rtol=2e-2), "bf16-MXU mismatch vs reference"

    print("KERNEL_OK")
</pallas_src>

<mosaic_0001>
module attributes {stable_mosaic.version = 11 : i64} {
  func.func @_sepconv_kernel(%arg0: i32, %arg1: memref<4x16x128xf32, #tpu.memory_space<vmem>>, %arg2: memref<3x128xf32, #tpu.memory_space<vmem>>, %arg3: memref<128x128xf32, #tpu.memory_space<vmem>>, %arg4: memref<1x128xf32, #tpu.memory_space<vmem>>, %arg5: memref<4x16x128xf32, #tpu.memory_space<vmem>>, %arg6: memref<4x18x128xf32, #tpu.memory_space<vmem>>) attributes {dimension_semantics = [#tpu.dimension_semantics<parallel>], iteration_bounds = array<i64: 2>, scalar_prefetch = 0 : i64, scratch_operands = 1 : i64, tpu.core_type = #tpu.core_type<tc>, window_params = [{transform_indices = @transform_0, window_bounds = array<i64: 4, 16, 128>}, {pipeline_mode = #tpu.pipeline_mode<synchronous>, transform_indices = @transform_1, window_bounds = array<i64: 3, 128>}, {pipeline_mode = #tpu.pipeline_mode<synchronous>, transform_indices = @transform_2, window_bounds = array<i64: 128, 128>}, {pipeline_mode = #tpu.pipeline_mode<synchronous>, transform_indices = @transform_3, window_bounds = array<i64: 1, 128>}, {transform_indices = @transform_4, window_bounds = array<i64: 4, 16, 128>}]} {
    %cst = arith.constant 0.000000e+00 : f32
    %0 = vector.broadcast %cst : f32 to vector<4x1x128xf32>
    %c0 = arith.constant 0 : index
    %c0_0 = arith.constant 0 : index
    %c0_1 = arith.constant 0 : index
    %1 = vector.load %arg6[%c0, %c0_0, %c0_1] : memref<4x18x128xf32, #tpu.memory_space<vmem>>, vector<4x1x128xf32>
    tpu.vector_store %arg6[%c0, %c0_0, %c0_1], %0 {strides = array<i32>} : memref<4x18x128xf32, #tpu.memory_space<vmem>>, vector<4x1x128xf32>,
    %cst_2 = arith.constant 0.000000e+00 : f32
    %2 = vector.broadcast %cst_2 : f32 to vector<4x1x128xf32>
    %c0_3 = arith.constant 0 : index
    %c17 = arith.constant 17 : index
    %c0_4 = arith.constant 0 : index
    %3 = vector.load %arg6[%c0_3, %c17, %c0_4] : memref<4x18x128xf32, #tpu.memory_space<vmem>>, vector<4x1x128xf32>
    tpu.vector_store %arg6[%c0_3, %c17, %c0_4], %2 {strides = array<i32>} : memref<4x18x128xf32, #tpu.memory_space<vmem>>, vector<4x1x128xf32>,
    %c0_5 = arith.constant 0 : index
    %c0_6 = arith.constant 0 : index
    %c0_7 = arith.constant 0 : index
    %4 = vector.load %arg1[%c0_5, %c0_6, %c0_7] : memref<4x16x128xf32, #tpu.memory_space<vmem>>, vector<4x16x128xf32>
    %c0_8 = arith.constant 0 : index
    %c1 = arith.constant 1 : index
    %c0_9 = arith.constant 0 : index
    %5 = vector.load %arg6[%c0_8, %c1, %c0_9] : memref<4x18x128xf32, #tpu.memory_space<vmem>>, vector<4x16x128xf32>
    tpu.vector_store %arg6[%c0_8, %c1, %c0_9], %4 {strides = array<i32>} : memref<4x18x128xf32, #tpu.memory_space<vmem>>, vector<4x16x128xf32>,
    %c0_10 = arith.constant 0 : index
    %c0_11 = arith.constant 0 : index
    %6 = vector.load %arg2[%c0_10, %c0_11] : memref<3x128xf32, #tpu.memory_space<vmem>>, vector<1x128xf32>
    %7 = vector.shape_cast %6 : vector<1x128xf32> to vector<128xf32>
    %8 = vector.shape_cast %7 : vector<128xf32> to vector<1x1x128xf32>
    %c0_12 = arith.constant 0 : index
    %c0_13 = arith.constant 0 : index
    %c0_14 = arith.constant 0 : index
    %9 = vector.load %arg6[%c0_12, %c0_13, %c0_14] : memref<4x18x128xf32, #tpu.memory_space<vmem>>, vector<4x16x128xf32>
    %10 = vector.broadcast %8 : vector<1x1x128xf32> to vector<4x16x128xf32>
    %11 = arith.mulf %9, %10 : vector<4x16x128xf32>
    %c1_15 = arith.constant 1 : index
    %c0_16 = arith.constant 0 : index
    %12 = vector.load %arg2[%c1_15, %c0_16] : memref<3x128xf32, #tpu.memory_space<vmem>>, vector<1x128xf32>
    %13 = vector.shape_cast %12 : vector<1x128xf32> to vector<128xf32>
    %14 = vector.shape_cast %13 : vector<128xf32> to vector<1x1x128xf32>
    %c0_17 = arith.constant 0 : index
    %c1_18 = arith.constant 1 : index
    %c0_19 = arith.constant 0 : index
    %15 = vector.load %arg6[%c0_17, %c1_18, %c0_19] : memref<4x18x128xf32, #tpu.memory_space<vmem>>, vector<4x16x128xf32>
    %16 = vector.broadcast %14 : vector<1x1x128xf32> to vector<4x16x128xf32>
    %17 = arith.mulf %15, %16 : vector<4x16x128xf32>
    %18 = arith.addf %11, %17 : vector<4x16x128xf32>
    %c2 = arith.constant 2 : index
    %c0_20 = arith.constant 0 : index
    %19 = vector.load %arg2[%c2, %c0_20] : memref<3x128xf32, #tpu.memory_space<vmem>>, vector<1x128xf32>
    %20 = vector.shape_cast %19 : vector<1x128xf32> to vector<128xf32>
    %21 = vector.shape_cast %20 : vector<128xf32> to vector<1x1x128xf32>
    %c0_21 = arith.constant 0 : index
    %c2_22 = arith.constant 2 : index
    %c0_23 = arith.constant 0 : index
    %22 = vector.load %arg6[%c0_21, %c2_22, %c0_23] : memref<4x18x128xf32, #tpu.memory_space<vmem>>, vector<4x16x128xf32>
    %23 = vector.broadcast %21 : vector<1x1x128xf32> to vector<4x16x128xf32>
    %24 = arith.mulf %22, %23 : vector<4x16x128xf32>
    %25 = arith.addf %18, %24 : vector<4x16x128xf32>
    %26 = vector.shape_cast %25 : vector<4x16x128xf32> to vector<64x128xf32>
    %c0_24 = arith.constant 0 : index
    %c0_25 = arith.constant 0 : index
    %27 = vector.load %arg3[%c0_24, %c0_25] : memref<128x128xf32, #tpu.memory_space<vmem>>, vector<128x128xf32>
    %cst_26 = arith.constant dense<0.000000e+00> : vector<64x128xf32>
    %28 = tpu.matmul %26, %27, %cst_26 {dimension_numbers = #tpu.dot_dimension_numbers<[1], [0], [0], [1], [0, 0, 1, 1], [], []>} : vector<64x128xf32>, vector<128x128xf32>, vector<64x128xf32> -> vector<64x128xf32>
    %c0_27 = arith.constant 0 : index
    %c0_28 = arith.constant 0 : index
    %29 = vector.load %arg4[%c0_27, %c0_28] : memref<1x128xf32, #tpu.memory_space<vmem>>, vector<1x128xf32>
    %30 = vector.broadcast %29 : vector<1x128xf32> to vector<64x128xf32>
    %31 = arith.addf %28, %30 : vector<64x128xf32>
    %32 = vector.shape_cast %31 : vector<64x128xf32> to vector<4x16x128xf32>
    %c0_29 = arith.constant 0 : index
    %c0_30 = arith.constant 0 : index
    %c0_31 = arith.constant 0 : index
    %33 = vector.load %arg5[%c0_29, %c0_30, %c0_31] : memref<4x16x128xf32, #tpu.memory_space<vmem>>, vector<4x16x128xf32>
    tpu.vector_store %arg5[%c0_29, %c0_30, %c0_31], %32 {strides = array<i32>} : memref<4x16x128xf32, #tpu.memory_space<vmem>>, vector<4x16x128xf32>,
    return
  }
  func.func @transform_0(%arg0: i32) -> (i32, i32, i32) {
    %c0_i32 = arith.constant 0 : i32
    %c0_i32_0 = arith.constant 0 : i32
    %c0_i32_1 = arith.constant 0 : i32
    return %arg0, %c0_i32, %c0_i32_0 : i32, i32, i32
  }
  func.func @transform_1(%arg0: i32) -> (i32, i32) {
    %c0_i32 = arith.constant 0 : i32
    %c0_i32_0 = arith.constant 0 : i32
    %c0_i32_1 = arith.constant 0 : i32
    return %c0_i32, %c0_i32_0 : i32, i32
  }
  func.func @transform_2(%arg0: i32) -> (i32, i32) {
    %c0_i32 = arith.constant 0 : i32
    %c0_i32_0 = arith.constant 0 : i32
    %c0_i32_1 = arith.constant 0 : i32
    return %c0_i32, %c0_i32_0 : i32, i32
  }
  func.func @transform_3(%arg0: i32) -> (i32, i32) {
    %c0_i32 = arith.constant 0 : i32
    %c0_i32_0 = arith.constant 0 : i32
    %c0_i32_1 = arith.constant 0 : i32
    return %c0_i32, %c0_i32_0 : i32, i32
  }
  func.func @transform_4(%arg0: i32) -> (i32, i32, i32) {
    %c0_i32 = arith.constant 0 : i32
    %c0_i32_0 = arith.constant 0 : i32
    %c0_i32_1 = arith.constant 0 : i32
    return %arg0, %c0_i32, %c0_i32_0 : i32, i32, i32
  }
}

</mosaic_0001>

<llo_original>
// kernel: tpu_custom_call.1
$region0: #{tpu_custom_call.1}
  #allocation0 [shape = 'u32[]', space=smem, size = 0x4, offset = 0x4, fixed_abs, tag = 'smem constant byte address 0x4 - core index']
  #allocation1 [shape = 'u32[144,128]{1,0:T(1,128)}', space=vmem, size = 0x12000, scoped, tag = 'internal scratch']
  #allocation2 [shape = 'f32[4,18,128]{2,1,0:T(8,128)}', space=vmem, size = 0xc000, scoped, tag = 'scratch operand']
  %s0 = inlined_call_operand.hbm [shape: f32[8,16,128], index: 0, kind: input, shape index: {}]
  %s1 = inlined_call_operand.hbm [shape: f32[3,128], index: 1, kind: input, shape index: {}]
  %s2 = inlined_call_operand.hbm [shape: f32[128,128], index: 2, kind: input, shape index: {}]
  %s3 = inlined_call_operand.vmem [shape: f32[1,128], index: 3, kind: input, shape index: {}]
  %s4 = inlined_call_operand.hbm [shape: f32[8,16,128], index: 4, kind: output, shape index: {}]
  %s5 = sld [smem:[#allocation0]]
  $region61: #{tpu_custom_call.1} parent=0
    _
  %s7 = ssub.s32 1, %s5
  %s8 = scalar_select 0, %s7, %s5
  $region1: #{tpu_custom_call.1} parent=0
    #allocation3 [shape = 'u8[65536]{0}', space=vmem, size = 0x10000, scoped, tag = 'input window, operand 0']
    #allocation4 [shape = 's32[2]{0}', space=sflag, size = 0x8, scoped, tag = 'scoped memory for tpu_custom_call.1']
    #allocation5 [shape = 's32[2]{0}', space=sflag, size = 0x8, scoped, tag = 'scoped memory for tpu_custom_call.1']
    #allocation6 [shape = 'u8[2048]{0}', space=vmem, size = 0x800, scoped, tag = 'input window, operand 1, single buffered']
    #allocation7 [shape = 's32[1]{0}', space=sflag, size = 0x4, scoped, tag = 'scoped memory for tpu_custom_call.1']
    #allocation8 [shape = 'u8[65536]{0}', space=vmem, size = 0x10000, scoped, tag = 'input window, operand 2, single buffered']
    #allocation9 [shape = 'u8[65536]{0}', space=vmem, size = 0x10000, scoped, tag = 'output window, operand 0']
    %9 = vsyncpa [#allocation4], 0
    %s10 = scalar_lea.sflag [#allocation4], 1
    %11 = vsyncpa %s10, 0
    %12 = vsyncpa [#allocation7], 0
    %13 = vsyncpa [#allocation5], 0
    %s14 = scalar_lea.sflag [#allocation5], 1
    %15 = vsyncpa %s14, 0
    loop: start=0, step=1, limit=4
    $region2: #{tpu_custom_call.1} parent=1 // loop_pre_header
      _
    $region3: #{tpu_custom_call.1} parent=1 // loop_header
      %s17 = sphi 0, %s21
      %p18 = scmp.ge.s32.totalorder %s17, 4
      %s27 = sphi 0, %s29
      %s30 = sphi 0, %s27
      %s31 = sphi 0, %s30
      %s47 = sphi 0, %s31
      %s51 = sphi 0, %s51
      %s53 = sphi 0, %s51
      %s54 = sphi 0, %s53
      %s68 = sphi 0, %s54
      %s72 = sphi 0, %s72
      %s74 = sphi 0, %s72
      %s75 = sphi 0, %s74
      %s89 = sphi 0, %s75
      %s93 = sphi 0, %s93
      %s95 = sphi 0, %s93
      %s96 = sphi 0, %s95
      %s110 = sphi 0, %s96
      %s116 = sphi 0, %s118
      %s119 = sphi 0, %s116
      %s120 = sphi 0, %s119
      %s136 = sphi 0, %s120
    $region4: #{tpu_custom_call.1} parent=1 // loop_header_branch
      %20 = sbr.rel (%p18) target = $region8
    $region5: #{tpu_custom_call.1} parent=1 // loop_body
      %s22 = ssub.s32 %s17, 1
      %s23 = ssub.s32 %s17, 2
      %s24 = sadd.s32 %s17, 1
      %s25 = ssub.s32 %s17, %s24
      %p26 = scmp.eq.s32.totalorder %s25, 0
      %s28 = sadd.s32 %s27, 1
      %s29 = scalar_select %p26, %s27, %s28
      %p32 = pneg %p26
      %p33 = scmp.eq.s32.totalorder %s17, 1
      %p34 = por %p32, %p33
      %p35 = scmp.ne.s32.totalorder %s27, %s30
      %p36 = scmp.eq.s32.totalorder %s17, 0
      %p37 = por %p35, %p36
      %p38 = scmp.ne.s32.totalorder %s27, %s30
      %p39 = scmp.eq.s32.totalorder %s22, 1
      %p40 = por %p38, %p39
      %p41 = scmp.ne.s32.totalorder %s30, %s31
      %p42 = scmp.eq.s32.totalorder %s22, 0
      %p43 = por %p41, %p42
      %p44 = scmp.ne.s32.totalorder %s30, %s31
      %p45 = scmp.eq.s32.totalorder %s23, 1
      %p46 = por %p44, %p45
      %p48 = scmp.ne.s32.totalorder %s31, %s47
      %p49 = scmp.eq.s32.totalorder %s23, 0
      %p50 = por %p48, %p49
      %s52 = sadd.s32 %s51, 1
      %p55 = scmp.eq.s32.totalorder %s17, 1
      %p56 = scmp.ne.s32.totalorder %s51, %s53
      %p57 = scmp.eq.s32.totalorder %s17, 0
      %p58 = por %p56, %p57
      %p59 = scmp.ne.s32.totalorder %s51, %s53
      %p60 = scmp.eq.s32.totalorder %s22, 1
      %p61 = por %p59, %p60
      %p62 = scmp.ne.s32.totalorder %s53, %s54
      %p63 = scmp.eq.s32.totalorder %s22, 0
      %p64 = por %p62, %p63
      %p65 = scmp.ne.s32.totalorder %s53, %s54
      %p66 = scmp.eq.s32.totalorder %s23, 1
      %p67 = por %p65, %p66
      %p69 = scmp.ne.s32.totalorder %s54, %s68
      %p70 = scmp.eq.s32.totalorder %s23, 0
      %p71 = por %p69, %p70
      %s73 = sadd.s32 %s72, 1
      %p76 = scmp.eq.s32.totalorder %s17, 1
      %p77 = scmp.ne.s32.totalorder %s72, %s74
      %p78 = scmp.eq.s32.totalorder %s17, 0
      %p79 = por %p77, %p78
      %p80 = scmp.ne.s32.totalorder %s72, %s74
      %p81 = scmp.eq.s32.totalorder %s22, 1
      %p82 = por %p80, %p81
      %p83 = scmp.ne.s32.totalorder %s74, %s75
      %p84 = scmp.eq.s32.totalorder %s22, 0
      %p85 = por %p83, %p84
      %p86 = scmp.ne.s32.totalorder %s74, %s75
      %p87 = scmp.eq.s32.totalorder %s23, 1
      %p88 = por %p86, %p87
      %p90 = scmp.ne.s32.totalorder %s75, %s89
      %p91 = scmp.eq.s32.totalorder %s23, 0
      %p92 = por %p90, %p91
      %s94 = sadd.s32 %s93, 1
      %p97 = scmp.eq.s32.totalorder %s17, 1
      %p98 = scmp.ne.s32.totalorder %s93, %s95
      %p99 = scmp.eq.s32.totalorder %s17, 0
      %p100 = por %p98, %p99
      %p101 = scmp.ne.s32.totalorder %s93, %s95
      %p102 = scmp.eq.s32.totalorder %s22, 1
      %p103 = por %p101, %p102
      %p104 = scmp.ne.s32.totalorder %s95, %s96
      %p105 = scmp.eq.s32.totalorder %s22, 0
      %p106 = por %p104, %p105
      %p107 = scmp.ne.s32.totalorder %s95, %s96
      %p108 = scmp.eq.s32.totalorder %s23, 1
      %p109 = por %p107, %p108
      %p111 = scmp.ne.s32.totalorder %s96, %s110
      %p112 = scmp.eq.s32.totalorder %s23, 0
      %p113 = por %p111, %p112
      %s114 = ssub.s32 %s17, %s24
      %p115 = scmp.eq.s32.totalorder %s114, 0
      %s117 = sadd.s32 %s116, 1
      %s118 = scalar_select %p115, %s116, %s117
      %p121 = pneg %p115
      %p122 = scmp.eq.s32.totalorder %s17, 1
      %p123 = por %p121, %p122
      %p124 = scmp.ne.s32.totalorder %s116, %s119
      %p125 = scmp.eq.s32.totalorder %s17, 0
      %p126 = por %p124, %p125
      %p127 = scmp.ne.s32.totalorder %s116, %s119
      %p128 = scmp.eq.s32.totalorder %s22, 1
      %p129 = por %p127, %p128
      %p130 = scmp.ne.s32.totalorder %s119, %s120
      %p131 = scmp.eq.s32.totalorder %s22, 0
      %p132 = por %p130, %p131
      %p133 = scmp.ne.s32.totalorder %s119, %s120
      %p134 = scmp.eq.s32.totalorder %s23, 1
      %p135 = por %p133, %p134
      %p137 = scmp.ne.s32.totalorder %s120, %s136
      %p138 = scmp.eq.s32.totalorder %s23, 0
      %p139 = por %p137, %p138
      %p140 = scmp.le.s32.totalorder 1, %s17
      %p141 = scmp.lt.s32.totalorder %s17, 3
      %p142 = pnand %p140, %p141
      %p143 = pneg %p142
      // Predicated region
      $region9: #{tpu_custom_call.1} parent=5 // pred_check
        _
      $region10: #{tpu_custom_call.1} parent=5 // pred_check_branch
        %145 = sbr.rel (%p142) target = $region12
      $region11: #{tpu_custom_call.1} parent=5 // pred_region
        %s146 = ssub.s32 %s17, 1
        // Predicated region
        $region13: #{tpu_custom_call.1} parent=11 // pred_check
          %p147 = pneg %p64
        $region14: #{tpu_custom_call.1} parent=11 // pred_check_branch
          %149 = sbr.rel (%p147) target = $region16
        $region15: #{tpu_custom_call.1} parent=11 // pred_region
          %s151 = ssub.s32 64, 64
          %152 = vsyncadd [#allocation7], %s151
          %s154 = sshll.u32 [#allocation6], 4
          %s155 = int_to_ptr.vmem [resolvable:$true] %s154
          %157 = dma.hbm_to_vmem [thread:$0]  %s1, 64, %s155, [#allocation7]
        $region16: #{tpu_custom_call.1} parent=11 // pred_fallthru
          _
        // Predicated region
        $region17: #{tpu_custom_call.1} parent=11 // pred_check
          %p158 = pneg %p85
        $region18: #{tpu_custom_call.1} parent=11 // pred_check_branch
          %160 = sbr.rel (%p158) target = $region20
        $region19: #{tpu_custom_call.1} parent=11 // pred_region
          %s162 = ssub.s32 2048, 2048
          %163 = vsyncadd [#allocation7], %s162
          %s164 = sshll.u32 [#allocation8], 4
          %s165 = int_to_ptr.vmem [resolvable:$true] %s164
          %170 = dma.hbm_to_vmem [thread:$0]  %s2, 2048, %s165, [#allocation7], 128, 128, 8
        $region20: #{tpu_custom_call.1} parent=11 // pred_fallthru
          _
        // Predicated region
        $region21: #{tpu_custom_call.1} parent=11 // pred_check
          %p171 = pneg %p106
        $region22: #{tpu_custom_call.1} parent=11 // pred_check_branch
          %173 = sbr.rel (%p171) target = $region24
        $region23: #{tpu_custom_call.1} parent=11 // pred_region
          _
        $region24: #{tpu_custom_call.1} parent=11 // pred_fallthru
          _
      $region12: #{tpu_custom_call.1} parent=5 // pred_fallthru
        _
      %p174 = scmp.lt.s32.totalorder %s17, 2
      // Predicated region
      $region25: #{tpu_custom_call.1} parent=5 // pred_check
        %p175 = pneg %p174
      $region26: #{tpu_custom_call.1} parent=5 // pred_check_branch
        %177 = sbr.rel (%p175) target = $region28
      $region27: #{tpu_custom_call.1} parent=5 // pred_region
        // Predicated region
        $region29: #{tpu_custom_call.1} parent=27 // pred_check
          %p178 = pneg %p37
        $region30: #{tpu_custom_call.1} parent=27 // pred_check_branch
          %180 = sbr.rel (%p178) target = $region32
        $region31: #{tpu_custom_call.1} parent=27 // pred_region
          %s181 = sand.u32 %s27, 1
          %s182 = scalar_lea.sflag [#allocation4], %s181
          %s183 = sand.u32 %s27, 1
          %s184 = smul.addr %s183, 64
          %s185 = scalar_lea.vmem [#allocation3], %s184
          %s186 = smul.u32 4, %s17
          %s188 = ssub.s32 1024, 1024
          %189 = vsyncadd %s182, %s188
          %s190 = smul.addr %s186, 2
          %s191 = smul.addr %s190, 128
          %s192 = scalar_lea.hbm %s0, %s191
          %s193 = sshll.u32 %s185, 4
          %s194 = int_to_ptr.vmem [resolvable:$true] %s193
          %199 = dma.hbm_to_vmem [thread:$0]  %s192, 1024, %s194, %s182, 128, 128, 8
        $region32: #{tpu_custom_call.1} parent=27 // pred_fallthru
          _
      $region28: #{tpu_custom_call.1} parent=5 // pred_fallthru
        _
      %p200 = scmp.le.s32.totalorder 1, %s17
      %p201 = scmp.lt.s32.totalorder %s17, 3
      %p202 = pnand %p200, %p201
      %p203 = pneg %p202
      // Predicated region
      $region33: #{tpu_custom_call.1} parent=5 // pred_check
        _
      $region34: #{tpu_custom_call.1} parent=5 // pred_check_branch
        %205 = sbr.rel (%p202) target = $region36
      $region35: #{tpu_custom_call.1} parent=5 // pred_region
        %s206 = ssub.s32 %s17, 1
        %s207 = sand.u32 %s30, 1
        %s208 = scalar_lea.sflag [#allocation4], %s207
        %s209 = sand.u32 %s30, 1
        %s210 = smul.addr %s209, 64
        %s211 = scalar_lea.vmem [#allocation3], %s210
        // Predicated region
        $region37: #{tpu_custom_call.1} parent=35 // pred_check
          %p212 = pneg %p43
        $region38: #{tpu_custom_call.1} parent=35 // pred_check_branch
          %214 = sbr.rel (%p212) target = $region40
        $region39: #{tpu_custom_call.1} parent=35 // pred_region
          %215 = dma.done %s208, 1024
        $region40: #{tpu_custom_call.1} parent=35 // pred_fallthru
          _
        // Predicated region
        $region41: #{tpu_custom_call.1} parent=35 // pred_check
          %p216 = pneg %p64
        $region42: #{tpu_custom_call.1} parent=35 // pred_check_branch
          %218 = sbr.rel (%p216) target = $region44
        $region43: #{tpu_custom_call.1} parent=35 // pred_region
          %219 = dma.done [#allocation7], 64
        $region44: #{tpu_custom_call.1} parent=35 // pred_fallthru
          _
        // Predicated region
        $region45: #{tpu_custom_call.1} parent=35 // pred_check
          %p220 = pneg %p85
        $region46: #{tpu_custom_call.1} parent=35 // pred_check_branch
          %222 = sbr.rel (%p220) target = $region48
        $region47: #{tpu_custom_call.1} parent=35 // pred_region
          %223 = dma.done [#allocation7], 2048
        $region48: #{tpu_custom_call.1} parent=35 // pred_fallthru
          _
        %s224 = sand.u32 %s30, 1
        %s225 = scalar_lea.sflag [#allocation4], %s224
        %s226 = sand.u32 %s30, 1
        %s227 = smul.addr %s226, 64
        %s228 = scalar_lea.vmem [#allocation3], %s227
        %p229 = pneg %p43
        %p230 = pneg %p40
        %p231 = pneg %p64
        %p232 = pneg %p61
        %p233 = pneg %p85
        %p234 = pneg %p82
        %p235 = pneg %p106
        %p236 = pneg %p103
        %p237 = pneg %p132
        %p238 = pneg %p129
        %s239 = sand.u32 %s119, 1
        %s240 = scalar_lea.sflag [#allocation5], %s239
        %s241 = sand.u32 %s119, 1
        %s242 = smul.addr %s241, 64
        %s243 = scalar_lea.vmem [#allocation9], %s242
        %s244 = smul.u32 4, %s22
        %s245 = smul.u32 4, %s22
        %246 = vst [vmem:[#allocation2] sm:$0x1] 0.0
        %247 = vst [vmem:[#allocation2 + $0x18] sm:$0x1] 0.0
        %248 = vst [vmem:[#allocation2 + $0x30] sm:$0x1] 0.0
        %249 = vst [vmem:[#allocation2 + $0x48] sm:$0x1] 0.0
        %250 = vst [vmem:[#allocation2 + $0x11] sm:$0x1] 0.0
        %251 = vst [vmem:[#allocation2 + $0x29] sm:$0x1] 0.0
        %252 = vst [vmem:[#allocation2 + $0x41] sm:$0x1] 0.0
        %253 = vst [vmem:[#allocation2 + $0x59] sm:$0x1] 0.0
        %v254 = vld [vmem:[%s211] sm:$0xff]
        %v255 = vld [vmem:[%s211 + $0x8] sm:$0xff]
        %v256 = vld [vmem:[%s211 + $0x10] sm:$0xff]
        %v257 = vld [vmem:[%s211 + $0x18] sm:$0xff]
        %v258 = vld [vmem:[%s211 + $0x20] sm:$0xff]
        %v259 = vld [vmem:[%s211 + $0x28] sm:$0xff]
        %v260 = vld [vmem:[%s211 + $0x30] sm:$0xff]
        %v261 = vld [vmem:[%s211 + $0x38] sm:$0xff]
        %262 = vst [vmem:[#allocation2 + $0x1] sm:$0xff] %v254
        %263 = vst [vmem:[#allocation2 + $0x9] sm:$0xff] %v255
        %264 = vst [vmem:[#allocation2 + $0x19] sm:$0xff] %v256
        %265 = vst [vmem:[#allocation2 + $0x21] sm:$0xff] %v257
        %266 = vst [vmem:[#allocation2 + $0x31] sm:$0xff] %v258
        %267 = vst [vmem:[#allocation2 + $0x39] sm:$0xff] %v259
        %268 = vst [vmem:[#allocation2 + $0x49] sm:$0xff] %v260
        %269 = vst [vmem:[#allocation2 + $0x51] sm:$0xff] %v261
        %v270 = vld [vmem:[#allocation6] sm:$0x1]
        %v271 = vld [vmem:[#allocation2] sm:$0xff]
        %v272 = vld [vmem:[#allocation2 + $0x8] sm:$0xff]
        %v273 = vld [vmem:[#allocation2 + $0x18] sm:$0xff]
        %v274 = vld [vmem:[#allocation2 + $0x20] sm:$0xff]
        %v275 = vld [vmem:[#allocation2 + $0x30] sm:$0xff]
        %v276 = vld [vmem:[#allocation2 + $0x38] sm:$0xff]
        %v277 = vld [vmem:[#allocation2 + $0x48] sm:$0xff]
        %v278 = vld [vmem:[#allocation2 + $0x50] sm:$0xff]
        %v279 = vlaneseq
        %v280 = vshrl.u32 %v279, 7
        %v281 = vsub.s32 0, %v280
        %v282 = vrot.slane %v270, %v281
        %v283 = vmul.f32 %v271, %v282
        %v284 = vmul.f32 %v272, %v282
        %v285 = vmul.f32 %v273, %v282
        %v286 = vmul.f32 %v274, %v282
        %v287 = vmul.f32 %v275, %v282
        %v288 = vmul.f32 %v276, %v282
        %v289 = vmul.f32 %v277, %v282
        %v290 = vmul.f32 %v278, %v282
        %v291 = vld [vmem:[#allocation6 + $0x1] sm:$0x1]
        %v292 = vld [vmem:[#allocation2 + $0x1] sm:$0xff]
        %v293 = vld [vmem:[#allocation2 + $0x9] sm:$0xff]
        %v294 = vld [vmem:[#allocation2 + $0x19] sm:$0xff]
        %v295 = vld [vmem:[#allocation2 + $0x21] sm:$0xff]
        %v296 = vld [vmem:[#allocation2 + $0x31] sm:$0xff]
        %v297 = vld [vmem:[#allocation2 + $0x39] sm:$0xff]
        %v298 = vld [vmem:[#allocation2 + $0x49] sm:$0xff]
        %v299 = vld [vmem:[#allocation2 + $0x51] sm:$0xff]
        %v300 = vlaneseq
        %v301 = vshrl.u32 %v300, 7
        %v302 = vsub.s32 0, %v301
        %v303 = vrot.slane %v291, %v302
        %v304 = vmul.f32 %v292, %v303
        %v305 = vmul.f32 %v293, %v303
        %v306 = vmul.f32 %v294, %v303
        %v307 = vmul.f32 %v295, %v303
        %v308 = vmul.f32 %v296, %v303
        %v309 = vmul.f32 %v297, %v303
        %v310 = vmul.f32 %v298, %v303
        %v311 = vmul.f32 %v299, %v303
        %v312 = vadd.f32 %v283, %v304
        %v313 = vadd.f32 %v284, %v305
        %v314 = vadd.f32 %v285, %v306
        %v315 = vadd.f32 %v286, %v307
        %v316 = vadd.f32 %v287, %v308
        %v317 = vadd.f32 %v288, %v309
        %v318 = vadd.f32 %v289, %v310
        %v319 = vadd.f32 %v290, %v311
        %v320 = vld [vmem:[#allocation6 + $0x2] sm:$0x1]
        %v321 = vld [vmem:[#allocation2 + $0x2] sm:$0xff]
        %v322 = vld [vmem:[#allocation2 + $0xa] sm:$0xff]
        %v323 = vld [vmem:[#allocation2 + $0x1a] sm:$0xff]
        %v324 = vld [vmem:[#allocation2 + $0x22] sm:$0xff]
        %v325 = vld [vmem:[#allocation2 + $0x32] sm:$0xff]
        %v326 = vld [vmem:[#allocation2 + $0x3a] sm:$0xff]
        %v327 = vld [vmem:[#allocation2 + $0x4a] sm:$0xff]
        %v328 = vld [vmem:[#allocation2 + $0x52] sm:$0xff]
        %v329 = vlaneseq
        %v330 = vshrl.u32 %v329, 7
        %v331 = vsub.s32 0, %v330
        %v332 = vrot.slane %v320, %v331
        %v333 = vmul.f32 %v321, %v332
        %v334 = vmul.f32 %v322, %v332
        %v335 = vmul.f32 %v323, %v332
        %v336 = vmul.f32 %v324, %v332
        %v337 = vmul.f32 %v325, %v332
        %v338 = vmul.f32 %v326, %v332
        %v339 = vmul.f32 %v327, %v332
        %v340 = vmul.f32 %v328, %v332
        %v341 = vadd.f32 %v312, %v333
        %v342 = vadd.f32 %v313, %v334
        %v343 = vadd.f32 %v314, %v335
        %v344 = vadd.f32 %v315, %v336
        %v345 = vadd.f32 %v316, %v337
        %v346 = vadd.f32 %v317, %v338
        %v347 = vadd.f32 %v318, %v339
        %v348 = vadd.f32 %v319, %v340
        %v349 = vld [vmem:[#allocation8] sm:$0xff]
        %v350 = vld [vmem:[#allocation8 + $0x8] sm:$0xff]
        %v351 = vld [vmem:[#allocation8 + $0x10] sm:$0xff]
        %v352 = vld [vmem:[#allocation8 + $0x18] sm:$0xff]
        %v353 = vld [vmem:[#allocation8 + $0x20] sm:$0xff]
        %v354 = vld [vmem:[#allocation8 + $0x28] sm:$0xff]
        %v355 = vld [vmem:[#allocation8 + $0x30] sm:$0xff]
        %v356 = vld [vmem:[#allocation8 + $0x38] sm:$0xff]
        %v357 = vld [vmem:[#allocation8 + $0x40] sm:$0xff]
        %v358 = vld [vmem:[#allocation8 + $0x48] sm:$0xff]
        %v359 = vld [vmem:[#allocation8 + $0x50] sm:$0xff]
        %v360 = vld [vmem:[#allocation8 + $0x58] sm:$0xff]
        %v361 = vld [vmem:[#allocation8 + $0x60] sm:$0xff]
        %v362 = vld [vmem:[#allocation8 + $0x68] sm:$0xff]
        %v363 = vld [vmem:[#allocation8 + $0x70] sm:$0xff]
        %v364 = vld [vmem:[#allocation8 + $0x78] sm:$0xff]
        %v365 = vld [vmem:[%s3] sm:$0x1]
        %v367 = vlaneseq
        %v368 = vshrl.u32 %v367, 7
        %v369 = vsub.s32 0, %v368
        %v370 = vrot.slane %v365, %v369
        %372 = vmatprep.subr.mxu0 0.0
        %373 = vmatpush1.msra.mxu0 %v364
        %374 = vmatprep.subr.mxu0 0.0
        %375 = vmatpush1.msra.mxu0 %v363
        %376 = vmatprep.subr.mxu0 0.0
        %377 = vmatpush1.msra.mxu0 %v362
        %378 = vmatprep.subr.mxu0 0.0
        %379 = vmatpush1.msra.mxu0 %v361
        %380 = vmatprep.subr.mxu0 0.0
        %381 = vmatpush1.msra.mxu0 %v360
        %382 = vmatprep.subr.mxu0 0.0
        %383 = vmatpush1.msra.mxu0 %v359
        %384 = vmatprep.subr.mxu0 0.0
        %385 = vmatpush1.msra.mxu0 %v358
        %386 = vmatprep.subr.mxu0 0.0
        %387 = vmatpush1.msra.mxu0 %v357
        %388 = vmatprep.subr.mxu0 0.0
        %389 = vmatpush1.msra.mxu0 %v356
        %390 = vmatprep.subr.mxu0 0.0
        %391 = vmatpush1.msra.mxu0 %v355
        %392 = vmatprep.subr.mxu0 0.0
        %393 = vmatpush1.msra.mxu0 %v354
        %394 = vmatprep.subr.mxu0 0.0
        %395 = vmatpush1.msra.mxu0 %v353
        %396 = vmatprep.subr.mxu0 0.0
        %397 = vmatpush1.msra.mxu0 %v352
        %398 = vmatprep.subr.mxu0 0.0
        %399 = vmatpush1.msra.mxu0 %v351
        %400 = vmatprep.subr.mxu0 0.0
        %401 = vmatpush1.msra.mxu0 %v350
        %402 = vmatprep.subr.mxu0 0.0
        %403 = vmatpush1.msra.mxu0 %v349
        %404 = vmatprep.subr.mxu0 0.0
        %405 = vmatpush2.msra.mxu0 0.0
        %406 = vmatprep.subr.mxu0 0.0
        %407 = vmatpush2.msra.mxu0 0.0
        %408 = vmatprep.subr.mxu0 0.0
        %409 = vmatpush2.msra.mxu0 0.0
        %410 = vmatprep.subr.mxu0 0.0
        %411 = vmatpush2.msra.mxu0 0.0
        %412 = vmatprep.subr.mxu0 0.0
        %413 = vmatpush2.msra.mxu0 0.0
        %414 = vmatprep.subr.mxu0 0.0
        %415 = vmatpush2.msra.mxu0 0.0
        %416 = vmatprep.subr.mxu0 0.0
        %417 = vmatpush2.msra.mxu0 0.0
        %418 = vmatprep.subr.mxu0 0.0
        %419 = vmatpush2.msra.mxu0 0.0
        %420 = vmatprep.subr.mxu0 0.0
        %421 = vmatpush2.msra.mxu0 0.0
        %422 = vmatprep.subr.mxu0 0.0
        %423 = vmatpush2.msra.mxu0 0.0
        %424 = vmatprep.subr.mxu0 0.0
        %425 = vmatpush2.msra.mxu0 0.0
        %426 = vmatprep.subr.mxu0 0.0
        %427 = vmatpush2.msra.mxu0 0.0
        %428 = vmatprep.subr.mxu0 0.0
        %429 = vmatpush2.msra.mxu0 0.0
        %430 = vmatprep.subr.mxu0 0.0
        %431 = vmatpush2.msra.mxu0 0.0
        %432 = vmatprep.subr.mxu0 0.0
        %433 = vmatpush2.msra.mxu0 0.0
        %434 = vmatprep.subr.mxu0 0.0
        %435 = vmatpush2.msra.mxu0 0.0
        %436 = vmatprep.mubr.f32.mxu0 0.0
        %437 = vmatmul.mubr.f32.gmra.mxu0 %v341
        %v438 = vpop.f32.mrf.mxu0
        %v439 = vadd.f32 %v370, %v438
        %v440 = vpop.f32.mrf.mxu0
        %441 = vmatprep.mubr.f32.mxu0 0.0
        %442 = vmatmul.mubr.f32.gmra.mxu0 %v342
        %v443 = vpop.f32.mrf.mxu0
        %v444 = vadd.f32 %v370, %v443
        %v445 = vpop.f32.mrf.mxu0
        %446 = vmatprep.mubr.f32.mxu0 0.0
        %447 = vmatmul.mubr.f32.gmra.mxu0 %v343
        %v448 = vpop.f32.mrf.mxu0
        %v449 = vadd.f32 %v370, %v448
        %v450 = vpop.f32.mrf.mxu0
        %451 = vmatprep.mubr.f32.mxu0 0.0
        %452 = vmatmul.mubr.f32.gmra.mxu0 %v344
        %v453 = vpop.f32.mrf.mxu0
        %v454 = vadd.f32 %v370, %v453
        %v455 = vpop.f32.mrf.mxu0
        %456 = vmatprep.mubr.f32.mxu0 0.0
        %457 = vmatmul.mubr.f32.gmra.mxu0 %v345
        %v458 = vpop.f32.mrf.mxu0
        %v459 = vadd.f32 %v370, %v458
        %v460 = vpop.f32.mrf.mxu0
        %461 = vmatprep.mubr.f32.mxu0 0.0
        %462 = vmatmul.mubr.f32.gmra.mxu0 %v346
        %v463 = vpop.f32.mrf.mxu0
        %v464 = vadd.f32 %v370, %v463
        %v465 = vpop.f32.mrf.mxu0
        %466 = vmatprep.mubr.f32.mxu0 0.0
        %467 = vmatmul.mubr.f32.gmra.mxu0 %v347
        %v468 = vpop.f32.mrf.mxu0
        %v469 = vadd.f32 %v370, %v468
        %v470 = vpop.f32.mrf.mxu0
        %471 = vmatprep.mubr.f32.mxu0 0.0
        %472 = vmatmul.mubr.f32.gmra.mxu0 %v348
        %v473 = vpop.f32.mrf.mxu0
        %v474 = vadd.f32 %v370, %v473
        %v475 = vpop.f32.mrf.mxu0
        %476 = vdwg.mxu0
        %477 = vst [vmem:[%s243] sm:$0xff] %v439
        %478 = vst [vmem:[%s243 + $0x8] sm:$0xff] %v444
        %479 = vst [vmem:[%s243 + $0x10] sm:$0xff] %v449
        %480 = vst [vmem:[%s243 + $0x18] sm:$0xff] %v454
        %481 = vst [vmem:[%s243 + $0x20] sm:$0xff] %v459
        %482 = vst [vmem:[%s243 + $0x28] sm:$0xff] %v464
        %483 = vst [vmem:[%s243 + $0x30] sm:$0xff] %v469
        %484 = vst [vmem:[%s243 + $0x38] sm:$0xff] %v474
        %s485 = sand.u32 %s119, 1
        %s486 = scalar_lea.sflag [#allocation5], %s485
        %s487 = sand.u32 %s119, 1
        %s488 = smul.addr %s487, 64
        %s489 = scalar_lea.vmem [#allocation9], %s488
        // Predicated region
        $region49: #{tpu_custom_call.1} parent=35 // pred_check
          %p490 = pneg %p129
        $region50: #{tpu_custom_call.1} parent=35 // pred_check_branch
          %492 = sbr.rel (%p490) target = $region52
        $region51: #{tpu_custom_call.1} parent=35 // pred_region
          %s493 = smul.u32 4, %s22
          %s495 = ssub.s32 1024, 1024
          %496 = vsyncadd %s486, %s495
          %s497 = smul.addr %s493, 2
          %s498 = smul.addr %s497, 128
          %s499 = scalar_lea.hbm %s4, %s498
          %s500 = sshll.u32 %s489, 4
          %s501 = int_to_ptr.vmem [resolvable:$true] %s500
          %506 = dma.vmem_to_hbm [thread:$0]  %s501, 1024, %s499, %s486, 128, 128, 8
        $region52: #{tpu_custom_call.1} parent=35 // pred_fallthru
          _
      $region36: #{tpu_custom_call.1} parent=5 // pred_fallthru
        _
      %p507 = scmp.le.s32.totalorder 2, %s17
      // Predicated region
      $region53: #{tpu_custom_call.1} parent=5 // pred_check
        %p508 = pneg %p507
      $region54: #{tpu_custom_call.1} parent=5 // pred_check_branch
        %510 = sbr.rel (%p508) target = $region56
      $region55: #{tpu_custom_call.1} parent=5 // pred_region
        %s511 = ssub.s32 %s17, 2
        // Predicated region
        $region57: #{tpu_custom_call.1} parent=55 // pred_check
          %p512 = pneg %p135
        $region58: #{tpu_custom_call.1} parent=55 // pred_check_branch
          %514 = sbr.rel (%p512) target = $region60
        $region59: #{tpu_custom_call.1} parent=55 // pred_region
          %s515 = sand.u32 %s120, 1
          %s516 = scalar_lea.sflag [#allocation5], %s515
          %s517 = sand.u32 %s120, 1
          %s518 = smul.addr %s517, 64
          %s519 = scalar_lea.vmem [#allocation9], %s518
          %520 = dma.done %s516, 1024
        $region60: #{tpu_custom_call.1} parent=55 // pred_fallthru
          _
      $region56: #{tpu_custom_call.1} parent=5 // pred_fallthru
        _
    $region6: #{tpu_custom_call.1} parent=1 // loop_footer
      %s21 = sadd.s32 1, %s17
    $region7: #{tpu_custom_call.1} parent=1 // loop_footer_branch
      %16 = sbr.rel target = $region3
    $region8: #{tpu_custom_call.1} parent=1 // loop_exit
      _
    %521 = vsyncpa [#allocation4], 1
    %s522 = scalar_lea.sflag [#allocation4], 1
    %523 = vsyncpa %s522, 1
    %524 = vsyncpa [#allocation7], 1
    %525 = vsyncpa [#allocation5], 1
    %s526 = scalar_lea.sflag [#allocation5], 1
    %527 = vsyncpa %s526, 1

</llo_original>
